<compile_context>
chip_gen: v7x
topology: tpu7x:2x2x1
jax: 0.10.0
libtpu: 0.0.40
codegen_flags: <defaults>
</compile_context>

<pallas_src>
import functools

import jax
import jax.numpy as jnp
from jax.experimental import pallas as pl
from jax.experimental.pallas import tpu as pltpu


def _vmem_limit_bytes(default=32 * 1024 * 1024):
    """Generation-aware scoped-VMEM budget: ~3/4 of physical VMEM, capped at 96 MiB.
    v5e/v6e (128 MiB) -> 96 MiB; v7x (64 MiB per TC) -> 48 MiB; falls back to 32 MiB."""
    try:
        cap = int(pltpu.get_tpu_info().vmem_capacity_bytes)
        return min((cap * 3) // 4, 96 * 1024 * 1024)
    except Exception:
        return default


VMEM_LIMIT_BYTES = _vmem_limit_bytes()


def _pick_tile(total, target):
    """Largest tile <= target dividing `total`, preferring sublane-friendly multiples of 8.
    Falls back to the largest divisor <= target (never silently to the full extent) to avoid
    unexpectedly huge blocks / VMEM OOM."""
    if total <= target:
        return total
    t = (target // 8) * 8
    while t >= 8:
        if total % t == 0:
            return t
        t -= 8
    for t in range(target, 0, -1):
        if total % t == 0:
            return t
    return total


# ----------------------------- kernels ---------------------------------------


def _linear_kernel(x_ref, w_ref, b_ref, o_ref, *, matmul_dtype):
    # x: (TM, F_in) activation tile; w: (F_in, F_out) pre-transposed, pre-cast bf16 weight
    # (resident across M steps); b: (1, F_out) f32.  f32 accumulation, cast on store.
    x = x_ref[...].astype(matmul_dtype)
    acc = jnp.dot(x, w_ref[...], preferred_element_type=jnp.float32)
    o_ref[...] = (acc + b_ref[...]).astype(o_ref.dtype)


def _qkv_linear_kernel(x_ref, w_ref, b_ref, oq_ref, ok_ref, ov_ref, *, matmul_dtype):
    # Fused self-attention projection: one x read, one (F_in, 3F) matmul, three (TM, F) outputs.
    f = oq_ref.shape[1]
    x = x_ref[...].astype(matmul_dtype)
    acc = jnp.dot(x, w_ref[...], preferred_element_type=jnp.float32) + b_ref[...]
    oq_ref[...] = acc[:, :f].astype(oq_ref.dtype)
    ok_ref[...] = acc[:, f:2 * f].astype(ok_ref.dtype)
    ov_ref[...] = acc[:, 2 * f:].astype(ov_ref.dtype)


def _attn_outproj_kernel(q_ref, k_ref, v_ref, wo_ref, bo_ref, o_ref, o_acc,
                         *, num_heads, matmul_dtype):
    # Blocks: q/o are (1, TQ, F); k/v are (1, SKV, F); wo is (F, F) resident; bo is (1, F).
    # The attention scale is pre-folded into the Q projection weights (no per-score multiply).
    f = q_ref.shape[2]
    d = f // num_heads
    q = q_ref[0].astype(matmul_dtype)            # (TQ, F)   (no-op cast: inputs arrive in bf16)
    k = k_ref[0].astype(matmul_dtype)            # (SKV, F)
    v = v_ref[0].astype(matmul_dtype)            # (SKV, F)

    # Head batching: stack static lane slices into an (H, ., D) leading batch dim so the score /
    # PV matmuls run as ONE batched dot_general instead of H tiny MXU passes.
    qs = jnp.stack([q[:, h * d:(h + 1) * d] for h in range(num_heads)], axis=0)   # (H, TQ,  D)
    ks = jnp.stack([k[:, h * d:(h + 1) * d] for h in range(num_heads)], axis=0)   # (H, SKV, D)
    vs = jnp.stack([v[:, h * d:(h + 1) * d] for h in range(num_heads)], axis=0)   # (H, SKV, D)

    s = jnp.einsum("hqd,hkd->hqk", qs, ks, preferred_element_type=jnp.float32)    # (H, TQ, SKV)
    # Numerically stable softmax in f32; approx reciprocal runs on the otherwise-idle EUP.
    s = s - jnp.max(s, axis=-1, keepdims=True)
    p = jnp.exp(s)
    p = p * pl.reciprocal(jnp.sum(p, axis=-1, keepdims=True), approx=True)
    # TODO(synk): attention dropout omitted (eval-mode identity); attn-mask path unsupported.
    o3 = jnp.einsum("hqk,hkd->hqd", p.astype(matmul_dtype), vs,
                    preferred_element_type=jnp.float32)                            # (H, TQ, D)

    # Assemble the full (TQ, F) tile in a VMEM f32 scratch (per-head writes stay on-chip), then
    # apply the fused output projection and do ONE lane-dense HBM store.
    for h in range(num_heads):
        o_acc[:, h * d:(h + 1) * d] = o3[h]
    out = jnp.dot(o_acc[...].astype(matmul_dtype), wo_ref[...],
                  preferred_element_type=jnp.float32) + bo_ref[...]
    o_ref[0] = out.astype(o_ref.dtype)


# ----------------------------- wrappers ---------------------------------------


def pallas_linear(x, w_t, b, *, matmul_dtype=jnp.bfloat16, tile_m=512, out_dtype=None):
    """y = x @ w_t + b, tiled over rows.  w_t must be (F_in, F_out), pre-cast to matmul_dtype."""
    *lead, f_in = x.shape
    f_out = w_t.shape[1]
    m = 1
    for s in lead:
        m *= s
    out_dtype = out_dtype or x.dtype
    x2 = x.reshape(m, f_in)
    tm = _pick_tile(m, tile_m)
    # TODO(synk): add an output-column 'parallel' axis and/or a K-reduction 'arbitrary' axis with
    # an f32 VMEM accumulator when the resident (F_in, F_out) weight approaches the VMEM budget.
    cost = pl.CostEstimate(
        flops=2 * m * f_in * f_out,
        transcendentals=0,
        bytes_accessed=int(x2.size * x2.dtype.itemsize + w_t.size * w_t.dtype.itemsize
                           + m * f_out * jnp.dtype(out_dtype).itemsize),
    )
    b2 = jnp.asarray(b, jnp.float32).reshape(1, f_out)
    y = pl.pallas_call(
        functools.partial(_linear_kernel, matmul_dtype=matmul_dtype),
        out_shape=jax.ShapeDtypeStruct((m, f_out), out_dtype),
        grid_spec=pltpu.PrefetchScalarGridSpec(
            num_scalar_prefetch=0,
            grid=(m // tm,),
            in_specs=[
                pl.BlockSpec((tm, f_in), lambda i: (i, 0)),      # activation tile, pipelined
                pl.BlockSpec((f_in, f_out), lambda i: (0, 0)),   # weight resident across M
                pl.BlockSpec((1, f_out), lambda i: (0, 0)),      # bias resident
            ],
            out_specs=pl.BlockSpec((tm, f_out), lambda i: (i, 0)),
        ),
        compiler_params=pltpu.CompilerParams(
            dimension_semantics=("parallel",),
            vmem_limit_bytes=VMEM_LIMIT_BYTES,
        ),
        cost_estimate=cost,
    )(x2, w_t, b2)
    return y.reshape(*lead, f_out)


def pallas_qkv_projection(x, w_qkv_t, b_qkv, *, matmul_dtype=jnp.bfloat16, tile_m=512,
                          out_dtype=None):
    """Fused self-attention Q/K/V projection: one HBM read of x, one (F, 3F) matmul, 3 outputs."""
    *lead, f_in = x.shape
    f_out = w_qkv_t.shape[1] // 3
    m = 1
    for s in lead:
        m *= s
    out_dtype = out_dtype or x.dtype
    x2 = x.reshape(m, f_in)
    tm = _pick_tile(m, tile_m)
    out_struct = jax.ShapeDtypeStruct((m, f_out), out_dtype)
    out_spec = pl.BlockSpec((tm, f_out), lambda i: (i, 0))
    cost = pl.CostEstimate(
        flops=2 * m * f_in * 3 * f_out,
        transcendentals=0,
        bytes_accessed=int(x2.size * x2.dtype.itemsize + w_qkv_t.size * w_qkv_t.dtype.itemsize
                           + 3 * m * f_out * jnp.dtype(out_dtype).itemsize),
    )
    b2 = jnp.asarray(b_qkv, jnp.float32).reshape(1, 3 * f_out)
    q2, k2, v2 = pl.pallas_call(
        functools.partial(_qkv_linear_kernel, matmul_dtype=matmul_dtype),
        out_shape=(out_struct, out_struct, out_struct),
        grid_spec=pltpu.PrefetchScalarGridSpec(
            num_scalar_prefetch=0,
            grid=(m // tm,),
            in_specs=[
                pl.BlockSpec((tm, f_in), lambda i: (i, 0)),
                pl.BlockSpec((f_in, 3 * f_out), lambda i: (0, 0)),
                pl.BlockSpec((1, 3 * f_out), lambda i: (0, 0)),
            ],
            out_specs=[out_spec, out_spec, out_spec],
        ),
        compiler_params=pltpu.CompilerParams(
            dimension_semantics=("parallel",),
            vmem_limit_bytes=VMEM_LIMIT_BYTES,
        ),
        cost_estimate=cost,
    )(x2, w_qkv_t, b2)
    shape = (*lead, f_out)
    return q2.reshape(shape), k2.reshape(shape), v2.reshape(shape)


def pallas_attention_outproj(qp, kp, vp, wo_t, bo, num_heads, *, out_dtype,
                             matmul_dtype=jnp.bfloat16, tile_q=256):
    """Scaled-dot-product attention + fused output projection over (B, S, F) blocks."""
    b, sq, f = qp.shape
    skv = kp.shape[1]
    tq = _pick_tile(sq, tile_q)
    # TODO(synk): for long sequences (esp. v7x: 64 MiB VMEM) add an innermost 'arbitrary' KV grid
    # axis with online (flash-style) softmax instead of holding full-length K/V blocks resident;
    # for B==1 reduce tq (or add a head grid axis) so both v7x TensorCores get parallel work.
    cost = pl.CostEstimate(
        flops=4 * b * sq * skv * f + 2 * b * sq * f * f,
        transcendentals=b * num_heads * sq * skv,
        bytes_accessed=int((qp.size + kp.size + vp.size) * qp.dtype.itemsize
                           + wo_t.size * wo_t.dtype.itemsize
                           + b * sq * f * jnp.dtype(out_dtype).itemsize),
    )
    qo_spec = pl.BlockSpec((1, tq, f), lambda bi, qi: (bi, qi, 0))
    kv_spec = pl.BlockSpec((1, skv, f), lambda bi, qi: (bi, 0, 0))
    return pl.pallas_call(
        functools.partial(_attn_outproj_kernel, num_heads=num_heads, matmul_dtype=matmul_dtype),
        out_shape=jax.ShapeDtypeStruct((b, sq, f), out_dtype),
        grid_spec=pltpu.PrefetchScalarGridSpec(
            num_scalar_prefetch=0,
            grid=(b, sq // tq),
            in_specs=[qo_spec, kv_spec, kv_spec,
                      pl.BlockSpec((f, f), lambda bi, qi: (0, 0)),   # wo resident
                      pl.BlockSpec((1, f), lambda bi, qi: (0, 0))],  # bo resident
            out_specs=qo_spec,
            scratch_shapes=[pltpu.VMEM((tq, f), jnp.float32)],
        ),
        compiler_params=pltpu.CompilerParams(
            dimension_semantics=("parallel", "parallel"),
            vmem_limit_bytes=VMEM_LIMIT_BYTES,
        ),
        cost_estimate=cost,
    )(qp, kp, vp, wo_t, bo)


def prepare_mha_params(params, num_heads, *, matmul_dtype=jnp.bfloat16):
    """One-time parameter prep (hoisted out of the per-call path): transpose the PyTorch
    (F_out, F_in) weights to (F_in, F_out), pre-cast to the MXU dtype, fold the attention scale
    into the Q projection, and pre-concatenate the fused QKV weight/bias."""
    f = params["wq"].shape[0]
    assert f % num_heads == 0, "features must be divisible by num_heads"
    d = f // num_heads
    scale = float(d) ** (-0.5)
    wq_t = (params["wq"].T * scale).astype(matmul_dtype)   # scale folded into Q projection
    wk_t = params["wk"].T.astype(matmul_dtype)
    wv_t = params["wv"].T.astype(matmul_dtype)
    wo_t = params["wo"].T.astype(matmul_dtype)
    bq = (jnp.asarray(params["bq"], jnp.float32) * scale)
    bk = jnp.asarray(params["bk"], jnp.float32)
    bv = jnp.asarray(params["bv"], jnp.float32)
    return {
        "num_heads": num_heads,
        "wq_t": wq_t, "wk_t": wk_t, "wv_t": wv_t, "wo_t": wo_t,
        "bq": bq.reshape(1, f), "bk": bk.reshape(1, f), "bv": bv.reshape(1, f),
        "bo": jnp.asarray(params["bo"], jnp.float32).reshape(1, f),
        "w_qkv_t": jnp.concatenate([wq_t, wk_t, wv_t], axis=1),              # (F, 3F)
        "b_qkv": jnp.concatenate([bq, bk, bv], axis=0).reshape(1, 3 * f),    # (1, 3F)
    }


def pallas_mha(q, k, v, prep, *, matmul_dtype=jnp.bfloat16):
    """Forward pass of the PyTorch MultiHeadAttention module (mask=None, eval-mode).
    `prep` comes from prepare_mha_params (weights pre-transposed / pre-cast / pre-fused)."""
    num_heads = prep["num_heads"]
    out_dtype = q.dtype
    if (q is k) and (k is v):
        # Self-attention: fused QKV projection -> one launch, x read from HBM once.
        qp, kp, vp = pallas_qkv_projection(q, prep["w_qkv_t"], prep["b_qkv"],
                                           matmul_dtype=matmul_dtype, out_dtype=matmul_dtype)
    else:
        qp = pallas_linear(q, prep["wq_t"], prep["bq"],
                           matmul_dtype=matmul_dtype, out_dtype=matmul_dtype)
        kp = pallas_linear(k, prep["wk_t"], prep["bk"],
                           matmul_dtype=matmul_dtype, out_dtype=matmul_dtype)
        vp = pallas_linear(v, prep["wv_t"], prep["bv"],
                           matmul_dtype=matmul_dtype, out_dtype=matmul_dtype)
    # Attention + fused output projection in (B, S, F) layout: bf16 intermediates, no HBM head
    # transposes, single lane-dense output store, and no separate out-proj HBM round trip.
    return pallas_attention_outproj(qp, kp, vp, prep["wo_t"], prep["bo"], num_heads,
                                    out_dtype=out_dtype, matmul_dtype=matmul_dtype)


# ----------------------------- reference / setup / main -----------------------


def mha_reference(q, k, v, params, num_heads):
    """Pure-JAX f32 reference mirroring the PyTorch module (mask=None, eval-mode)."""
    def lin(x, w, b):
        return jnp.einsum("bsf,gf->bsg", x, w) + b
    bsz, sq, f = q.shape
    d = f // num_heads
    qp = lin(q, params["wq"], params["bq"]).reshape(bsz, sq, num_heads, d).transpose(0, 2, 1, 3)
    kp = lin(k, params["wk"], params["bk"]).reshape(bsz, -1, num_heads, d).transpose(0, 2, 1, 3)
    vp = lin(v, params["wv"], params["bv"]).reshape(bsz, -1, num_heads, d).transpose(0, 2, 1, 3)
    s = jnp.einsum("bhqd,bhkd->bhqk", qp, kp) * (float(d) ** (-0.5))
    p = jax.nn.softmax(s, axis=-1)
    o = jnp.einsum("bhqk,bhkd->bhqd", p, vp)
    o = o.transpose(0, 2, 1, 3).reshape(bsz, sq, f)
    return lin(o, params["wo"], params["bo"])


def init_params(key, features):
    ks = jax.random.split(key, 8)
    bound = features ** (-0.5)
    def w(k_):
        return (jax.random.uniform(k_, (features, features), jnp.float32) * 2.0 - 1.0) * bound
    def b(k_):
        return (jax.random.uniform(k_, (features,), jnp.float32) * 2.0 - 1.0) * bound
    return {
        "wq": w(ks[0]), "bq": b(ks[1]),
        "wk": w(ks[2]), "bk": b(ks[3]),
        "wv": w(ks[4]), "bv": b(ks[5]),
        "wo": w(ks[6]), "bo": b(ks[7]),
    }


if __name__ == "__main__":
    B, S, F, H = 2, 8, 32, 4  # batch, seq, features, num_heads (head_dim = 8)

    key = jax.random.PRNGKey(0)
    kpar, kq, kk, kv = jax.random.split(key, 4)
    params = init_params(kpar, F)
    prep = prepare_mha_params(params, num_heads=H)   # one-time weight prep, hoisted out of forward

    q = jax.random.normal(kq, (B, S, F), jnp.float32)
    k = jax.random.normal(kk, (B, S, F), jnp.float32)
    v = jax.random.normal(kv, (B, S, F), jnp.float32)

    # General path (distinct q/k/v), matching the module's generic signature.
    out = pallas_mha(q, k, v, prep)
    jax.block_until_ready(out)
    assert out.shape == (B, S, F)
    err = float(jnp.max(jnp.abs(out - mha_reference(q, k, v, params, H))))
    assert err < 5e-2, f"cross-attention max abs error too large: {err}"

    # Self-attention path: exercises the fused-QKV projection kernel.
    out_self = pallas_mha(q, q, q, prep)
    jax.block_until_ready(out_self)
    assert out_self.shape == (B, S, F)
    err_self = float(jnp.max(jnp.abs(out_self - mha_reference(q, q, q, params, H))))
    assert err_self < 5e-2, f"self-attention max abs error too large: {err_self}"

    print("KERNEL_OK")
</pallas_src>

<mosaic_0001>
module attributes {stable_mosaic.version = 11 : i64} {
  func.func @_linear_kernel(%arg0: i32, %arg1: memref<16x32xf32, #tpu.memory_space<vmem>>, %arg2: memref<32x32xbf16, #tpu.memory_space<vmem>>, %arg3: memref<1x32xf32, #tpu.memory_space<vmem>>, %arg4: memref<16x32xbf16, #tpu.memory_space<vmem>>) attributes {dimension_semantics = [#tpu.dimension_semantics<parallel>], iteration_bounds = array<i64: 1>, scalar_prefetch = 0 : i64, scratch_operands = 0 : i64, tpu.core_type = #tpu.core_type<tc>, window_params = [{transform_indices = @transform_0, window_bounds = array<i64: 16, 32>}, {pipeline_mode = #tpu.pipeline_mode<synchronous>, transform_indices = @transform_1, window_bounds = array<i64: 32, 32>}, {pipeline_mode = #tpu.pipeline_mode<synchronous>, transform_indices = @transform_2, window_bounds = array<i64: 1, 32>}, {transform_indices = @transform_3, window_bounds = array<i64: 16, 32>}]} {
    %c0 = arith.constant 0 : index
    %c0_0 = arith.constant 0 : index
    %0 = vector.load %arg1[%c0, %c0_0] : memref<16x32xf32, #tpu.memory_space<vmem>>, vector<16x32xf32>
    %1 = arith.truncf %0 : vector<16x32xf32> to vector<16x32xbf16>
    %c0_1 = arith.constant 0 : index
    %c0_2 = arith.constant 0 : index
    %2 = vector.load %arg2[%c0_1, %c0_2] : memref<32x32xbf16, #tpu.memory_space<vmem>>, vector<32x32xbf16>
    %cst = arith.constant dense<0.000000e+00> : vector<16x32xf32>
    %3 = tpu.matmul %1, %2, %cst {dimension_numbers = #tpu.dot_dimension_numbers<[1], [0], [0], [1], [0, 0, 1, 1], [], []>} : vector<16x32xbf16>, vector<32x32xbf16>, vector<16x32xf32> -> vector<16x32xf32>
    %c0_3 = arith.constant 0 : index
    %c0_4 = arith.constant 0 : index
    %4 = vector.load %arg3[%c0_3, %c0_4] : memref<1x32xf32, #tpu.memory_space<vmem>>, vector<1x32xf32>
    %5 = vector.broadcast %4 : vector<1x32xf32> to vector<16x32xf32>
    %6 = arith.addf %3, %5 : vector<16x32xf32>
    %7 = arith.truncf %6 : vector<16x32xf32> to vector<16x32xbf16>
    %c0_5 = arith.constant 0 : index
    %c0_6 = arith.constant 0 : index
    %8 = vector.load %arg4[%c0_5, %c0_6] : memref<16x32xbf16, #tpu.memory_space<vmem>>, vector<16x32xbf16>
    tpu.vector_store %arg4[%c0_5, %c0_6], %7 {strides = array<i32>} : memref<16x32xbf16, #tpu.memory_space<vmem>>, vector<16x32xbf16>,
    return
  }
  func.func @transform_0(%arg0: i32) -> (i32, i32) {
    %c0_i32 = arith.constant 0 : i32
    %c0_i32_0 = arith.constant 0 : i32
    return %arg0, %c0_i32 : i32, i32
  }
  func.func @transform_1(%arg0: i32) -> (i32, i32) {
    %c0_i32 = arith.constant 0 : i32
    %c0_i32_0 = arith.constant 0 : i32
    %c0_i32_1 = arith.constant 0 : i32
    return %c0_i32, %c0_i32_0 : i32, i32
  }
  func.func @transform_2(%arg0: i32) -> (i32, i32) {
    %c0_i32 = arith.constant 0 : i32
    %c0_i32_0 = arith.constant 0 : i32
    %c0_i32_1 = arith.constant 0 : i32
    return %c0_i32, %c0_i32_0 : i32, i32
  }
  func.func @transform_3(%arg0: i32) -> (i32, i32) {
    %c0_i32 = arith.constant 0 : i32
    %c0_i32_0 = arith.constant 0 : i32
    return %arg0, %c0_i32 : i32, i32
  }
}

</mosaic_0001>

<llo_original>
// kernel: tpu_custom_call.1
$region0: #{tpu_custom_call.1}
  #allocation0 [shape = 'u32[]', space=smem, size = 0x4, offset = 0x4, fixed_abs, tag = 'smem constant byte address 0x4 - core index']
  #allocation1 [shape = 'u32[144,128]{1,0:T(1,128)}', space=vmem, size = 0x12000, scoped, tag = 'internal scratch']
  %s0 = inlined_call_operand.hbm [shape: f32[16,32], index: 0, kind: input, shape index: {}]
  %s1 = inlined_call_operand.hbm [shape: bf16[32,32], index: 1, kind: input, shape index: {}]
  %s2 = inlined_call_operand.vmem [shape: f32[1,32], index: 2, kind: input, shape index: {}]
  %s3 = inlined_call_operand.hbm [shape: bf16[16,32], index: 3, kind: output, shape index: {}]
  %s4 = sld [smem:[#allocation0]]
  $region30: #{tpu_custom_call.1} parent=0
    _
  %s6 = ssub.s32 1, %s4
  %s7 = scalar_select 0, %s6, %s4
  $region1: #{tpu_custom_call.1} parent=0
    #allocation2 [shape = 'u8[8192]{0}', space=vmem, size = 0x2000, scoped, tag = 'input window, operand 0, single buffered']
    #allocation3 [shape = 's32[1]{0}', space=sflag, size = 0x4, scoped, tag = 'scoped memory for tpu_custom_call.1']
    #allocation4 [shape = 's32[1]{0}', space=sflag, size = 0x4, scoped, tag = 'scoped memory for tpu_custom_call.1']
    #allocation5 [shape = 'u8[8192]{0}', space=vmem, size = 0x2000, scoped, tag = 'input window, operand 1, single buffered']
    #allocation6 [shape = 's32[1]{0}', space=sflag, size = 0x4, scoped, tag = 'scoped memory for tpu_custom_call.1']
    #allocation7 [shape = 'u8[4096]{0}', space=vmem, size = 0x1000, scoped, tag = 'output window, operand 0, single buffered']
    %8 = vsyncpa [#allocation3], 0
    %9 = vsyncpa [#allocation6], 0
    %10 = vsyncpa [#allocation4], 0
    // Predicated region
    $region2: #{tpu_custom_call.1} parent=1 // pred_check
      _
    $region3: #{tpu_custom_call.1} parent=1 // pred_check_branch
      %12 = sbr.rel (0) target = $region5
    $region4: #{tpu_custom_call.1} parent=1 // pred_region
      %s14 = ssub.s32 256, 256
      %15 = vsyncadd [#allocation3], %s14
      %s16 = sshll.u32 [#allocation2], 4
      %s17 = int_to_ptr.vmem [resolvable:$true] %s16
      %22 = dma.hbm_to_vmem [thread:$0]  %s0, 256, %s17, [#allocation3], 128, 128, 8
    $region5: #{tpu_custom_call.1} parent=1 // pred_fallthru
      _
    // Predicated region
    $region6: #{tpu_custom_call.1} parent=1 // pred_check
      _
    $region7: #{tpu_custom_call.1} parent=1 // pred_check_branch
      %24 = sbr.rel (0) target = $region9
    $region8: #{tpu_custom_call.1} parent=1 // pred_region
      %s26 = ssub.s32 256, 256
      %27 = vsyncadd [#allocation6], %s26
      %s28 = sshll.u32 [#allocation5], 4
      %s29 = int_to_ptr.vmem [resolvable:$true] %s28
      %34 = dma.hbm_to_vmem [thread:$0]  %s1, 256, %s29, [#allocation6], 64, 64, 4
    $region9: #{tpu_custom_call.1} parent=1 // pred_fallthru
      _
    // Predicated region
    $region10: #{tpu_custom_call.1} parent=1 // pred_check
      _
    $region11: #{tpu_custom_call.1} parent=1 // pred_check_branch
      %36 = sbr.rel (0) target = $region13
    $region12: #{tpu_custom_call.1} parent=1 // pred_region
      _
    $region13: #{tpu_custom_call.1} parent=1 // pred_fallthru
      _
    // Predicated region
    $region14: #{tpu_custom_call.1} parent=1 // pred_check
      _
    $region15: #{tpu_custom_call.1} parent=1 // pred_check_branch
      %38 = sbr.rel (0) target = $region17
    $region16: #{tpu_custom_call.1} parent=1 // pred_region
      %39 = dma.done [#allocation3], 256
    $region17: #{tpu_custom_call.1} parent=1 // pred_fallthru
      _
    // Predicated region
    $region18: #{tpu_custom_call.1} parent=1 // pred_check
      _
    $region19: #{tpu_custom_call.1} parent=1 // pred_check_branch
      %41 = sbr.rel (0) target = $region21
    $region20: #{tpu_custom_call.1} parent=1 // pred_region
      %42 = dma.done [#allocation6], 256
    $region21: #{tpu_custom_call.1} parent=1 // pred_fallthru
      _
    %v44 = vld [vmem:[#allocation2] sm:$0xff]
    %v45 = vld [vmem:[#allocation2 + $0x8] sm:$0xff]
    %v46 = vpack.c.bf16 %v45, %v44
    %v47 = vld [vmem:[#allocation5] sm:$0xf]
    %v48 = vld [vmem:[#allocation5 + $0x4] sm:$0xf]
    %v49 = vld [vmem:[#allocation5 + $0x8] sm:$0xf]
    %v50 = vld [vmem:[#allocation5 + $0xc] sm:$0xf]
    %v51 = vld [vmem:[%s2] sm:$0x1]
    %v53 = vlaneseq
    %v54 = vshrl.u32 %v53, 7
    %v55 = vsub.s32 0, %v54
    %v56 = vrot.slane %v51, %v55
    %v62 = vunpack.c.l.b16 %v47
    %v63 = vunpack.c.l.b16 %v48
    %v64 = vunpack.c.l.b16 %v49
    %v65 = vunpack.c.l.b16 %v50
    %v66 = vpack.c.b16 %v63, %v62
    %v67 = vpack.c.b16 %v65, %v64
    %vm70 = vcmask 261120
    %v72 = vsel %vm70, %v46, 0
    %74 = vmatprep.subr.bf16.mxu0 0
    %75 = vmatpush1.bf16.msra.mxu0 %v66
    %76 = vmatprep.subr.bf16.mxu0 0
    %77 = vmatpush1.bf16.msra.mxu0 %v67
    %78 = vmatprep.subr.bf16.mxu0 0
    %79 = vmatpush1.bf16.msra.mxu0 0
    %80 = vmatprep.subr.bf16.mxu0 0
    %81 = vmatpush1.bf16.msra.mxu0 0
    %82 = vmatprep.subr.bf16.mxu0 0
    %83 = vmatpush1.bf16.msra.mxu0 0
    %84 = vmatprep.subr.bf16.mxu0 0
    %85 = vmatpush1.bf16.msra.mxu0 0
    %86 = vmatprep.subr.bf16.mxu0 0
    %87 = vmatpush1.bf16.msra.mxu0 0
    %88 = vmatprep.subr.bf16.mxu0 0
    %89 = vmatpush1.bf16.msra.mxu0 0
    %90 = vmatprep.subr.bf16.mxu0 0
    %91 = vmatpush1.bf16.msra.mxu0 0
    %92 = vmatprep.subr.bf16.mxu0 0
    %93 = vmatpush1.bf16.msra.mxu0 0
    %94 = vmatprep.subr.bf16.mxu0 0
    %95 = vmatpush1.bf16.msra.mxu0 0
    %96 = vmatprep.subr.bf16.mxu0 0
    %97 = vmatpush1.bf16.msra.mxu0 0
    %98 = vmatprep.subr.bf16.mxu0 0
    %99 = vmatpush1.bf16.msra.mxu0 0
    %100 = vmatprep.subr.bf16.mxu0 0
    %101 = vmatpush1.bf16.msra.mxu0 0
    %102 = vmatprep.subr.bf16.mxu0 0
    %103 = vmatpush1.bf16.msra.mxu0 0
    %104 = vmatprep.subr.bf16.mxu0 0
    %105 = vmatpush1.bf16.msra.mxu0 0
    %106 = vmatprep.mubr.bf16.mxu0 0
    %107 = vmatmul.mubr.bf16.gmra.mrb[0].mxu0 %v72
    %v108 = vpop.f32.mrb[0].mxu0
    %v109 = vadd.f32 %v56, %v108
    %v110 = vpop.f32.mrb[0].mxu0
    %v111 = vpop.f32.mrb[0].mxu0
    %v112 = vadd.f32 %v56, %v111
    %v113 = vpop.f32.mrb[0].mxu0
    %114 = vdwg.mxu0
    %v115 = vpack.c.bf16 %v112, %v109
    %v117 = vunpack.c.l.b16 %v115
    %v118 = vunpack.c.h.b16 %v115
    %v119 = vpack.c.b16 %v117, %v117
    %v120 = vpack.c.b16 %v118, %v118
    %vm123 = vcmask 257024
    %124 = vst.msk [vmem:[#allocation7] sm:$0xf] %vm123, %v119
    %125 = vst.msk [vmem:[#allocation7 + $0x4] sm:$0xf] %vm123, %v120
    // Predicated region
    $region22: #{tpu_custom_call.1} parent=1 // pred_check
      _
    $region23: #{tpu_custom_call.1} parent=1 // pred_check_branch
      %127 = sbr.rel (0) target = $region25
    $region24: #{tpu_custom_call.1} parent=1 // pred_region
      %s129 = ssub.s32 128, 128
      %130 = vsyncadd [#allocation4], %s129
      %s131 = sshll.u32 [#allocation7], 4
      %s132 = int_to_ptr.vmem [resolvable:$true] %s131
      %137 = dma.vmem_to_hbm [thread:$0]  %s132, 128, %s3, [#allocation4], 64, 64, 4
    $region25: #{tpu_custom_call.1} parent=1 // pred_fallthru
      _
    // Predicated region
    $region26: #{tpu_custom_call.1} parent=1 // pred_check
      _
    $region27: #{tpu_custom_call.1} parent=1 // pred_check_branch
      %139 = sbr.rel (0) target = $region29
    $region28: #{tpu_custom_call.1} parent=1 // pred_region
      %140 = dma.done [#allocation4], 128
    $region29: #{tpu_custom_call.1} parent=1 // pred_fallthru
      _
    %141 = vsyncpa [#allocation3], 1
    %142 = vsyncpa [#allocation6], 1
    %143 = vsyncpa [#allocation4], 1

</llo_original>
